<compile_context>
chip_gen: v7x
topology: tpu7x:2x2x1
jax: 0.10.0
libtpu: 0.0.40
codegen_flags: <defaults>
</compile_context>

<pallas_src>
import functools
import math

import jax
import jax.numpy as jnp
import numpy as np
from jax.experimental import pallas as pl
from jax.experimental.pallas import tpu as pltpu


def _round_up(x, m):
    return ((x + m - 1) // m) * m


def _pad_axis(x, axis, new_size, value=0.0):
    pad = new_size - x.shape[axis]
    if pad <= 0:
        return x
    widths = [(0, 0)] * x.ndim
    widths[axis] = (0, pad)
    return jnp.pad(x, widths, constant_values=value)


# ----------------------------------------------------------------------------
# Part 1: TimeReasoningCell
# ----------------------------------------------------------------------------
def _time_reasoning_kernel(logits_ref, z_ref):
    # f32 cast inside the kernel: the HBM->VMEM DMA moves the original dtype.
    x = logits_ref[...].astype(jnp.float32)
    # logits.data.masked_fill_(logits == -inf, 0)
    x = jnp.where(x == -jnp.inf, jnp.float32(0.0), x)
    # logits.sum(-1)
    s = jnp.sum(x, axis=-1)
    # logits.masked_fill_(logits == 0, -1000.0).  NOTE: like the PyTorch
    # in-place op, this also catches rows whose finite entries cancel to 0.
    z_ref[...] = jnp.where(s == 0.0, jnp.float32(-1000.0), s)


def time_reasoning_cell_ref(logits):
    """Pure-JAX reference (also the tiny-shape fast path)."""
    B = logits.shape[0]
    x = logits.astype(jnp.float32)
    x = jnp.where(x == -jnp.inf, 0.0, x)
    s = x.sum(-1).reshape(B, -1)
    s = jnp.where(s == 0.0, -1000.0, s)
    return {"z": s, "z_back": s}


def time_reasoning_cell(logits, *, batch_block=8, force_pallas=False,
                        min_pallas_elems=4096):
    """Forward of TimeReasoningCell; returns the posterior logits.

    Batch-tiled grid, lane-dense (128-padded) flattened output.  Tiny inputs
    fall back to the pure-JAX path (pallas_call launch + per-step overhead
    exceeds the work and XLA fuses where/sum/where for free).
    """
    B = logits.shape[0]
    K = logits.shape[-1]
    M = 1
    for d in logits.shape[1:-1]:
        M *= int(d)

    if not force_pallas and M * K < min_pallas_elems:
        return time_reasoning_cell_ref(logits)

    x = logits.reshape(B, M, K)
    M_pad = _round_up(M, 128)                # lane-dense flattened output
    Bb = max(1, min(batch_block, B))
    B_pad = _round_up(B, Bb)
    x = _pad_axis(_pad_axis(x, 1, M_pad), 0, B_pad)   # padded rows sum to 0 -> sliced off

    z_p = pl.pallas_call(
        _time_reasoning_kernel,
        out_shape=jax.ShapeDtypeStruct((B_pad, M_pad), jnp.float32),
        grid=(B_pad // Bb,),
        in_specs=[pl.BlockSpec((Bb, M_pad, K), lambda b: (b, 0, 0))],
        out_specs=pl.BlockSpec((Bb, M_pad), lambda b: (b, 0)),
        compiler_params=pltpu.CompilerParams(
            dimension_semantics=("parallel",)),
    )(x)

    z = z_p[:B, :M]
    # TODO(synk): modulars.GumbelCategorical (distribution object / sampling /
    # temperature) has no Pallas equivalent; we return the logits that
    # parameterize z and z_back (both built from the same cleaned logits).
    return {"z": z, "z_back": z}


# ----------------------------------------------------------------------------
# Part 2: OneSideInterModalityUpdate (DFAF one-side inter-modality attention)
# ----------------------------------------------------------------------------
def _head_pad_cols(w, num_head, dh, dh_pad):
    """(rows, num_head*dh) -> (rows, num_head*dh_pad), zero-padded per head."""
    rows = w.shape[0]
    w3 = w.reshape(rows, num_head, dh)
    w3 = jnp.pad(w3, ((0, 0), (0, 0), (0, dh_pad - dh)))
    return w3.reshape(rows, num_head * dh_pad)


def _head_pad_rows(w, num_head, dh, dh_pad):
    """(num_head*dh, cols) -> (num_head*dh_pad, cols), zero-padded per head."""
    cols = w.shape[1]
    w3 = w.reshape(num_head, dh, cols)
    w3 = jnp.pad(w3, ((0, 0), (0, dh_pad - dh), (0, 0)))
    return w3.reshape(num_head * dh_pad, cols)


def prepare_params(params, num_head):
    """One-time parameter transform (outside the per-call path):
       * fold 1/sqrt(dh) into w_tgt / b_tgt (queries only feed the score matmul)
       * split w_out into tgt half / update half (kills both concatenates)
       * head-major, 128-lane-padded per-head layout so every in-kernel head
         slice is vreg-tile aligned (no XLU relayout copies) and the update
         projection is a single K=num_head*128 matmul
       * zero-pad the output projection to a lane-dense 128-multiple width
       * cast MXU operands to bf16; biases stay f32
    """
    w_src, b_src = params["w_src"], params["b_src"]
    w_tgt, b_tgt = params["w_tgt"], params["b_tgt"]
    w_out, b_out = params["w_out"], params["b_out"]
    S = w_src.shape[0]
    T = w_tgt.shape[0]
    O = w_tgt.shape[1]
    dh = O // num_head
    dh_pad = _round_up(dh, 128)
    Hd = num_head * dh_pad
    O_pad = _round_up(O, 128)
    scale = 1.0 / math.sqrt(dh)

    w_key = _head_pad_cols(w_src[:, :O], num_head, dh, dh_pad)
    w_val = _head_pad_cols(w_src[:, O:], num_head, dh, dh_pad)
    b_key = _head_pad_cols(b_src[:, :O], num_head, dh, dh_pad)
    b_val = _head_pad_cols(b_src[:, O:], num_head, dh, dh_pad)

    return {
        "w_src": jnp.concatenate([w_key, w_val], axis=1).astype(jnp.bfloat16),  # (S, 2*Hd)
        "b_src": jnp.concatenate([b_key, b_val], axis=1).astype(jnp.float32),   # (1, 2*Hd)
        "w_tgt": _head_pad_cols(w_tgt * scale, num_head, dh, dh_pad).astype(jnp.bfloat16),
        "b_tgt": _head_pad_cols(b_tgt * scale, num_head, dh, dh_pad).astype(jnp.float32),
        "w_out_tgt": _pad_axis(w_out[:T, :], 1, O_pad).astype(jnp.bfloat16),     # (T, O_pad)
        "w_out_upd": _pad_axis(_head_pad_rows(w_out[T:, :], num_head, dh, dh_pad),
                               1, O_pad).astype(jnp.bfloat16),                   # (Hd, O_pad)
        "b_out": _pad_axis(b_out, 1, O_pad).astype(jnp.float32),
        "num_head": num_head,
        "dh": dh,
        "dh_pad": dh_pad,
        "output_size": O,
        "output_size_padded": O_pad,
    }


def _one_side_kernel(src_ref, tgt_ref, smask_row_ref, tmask_col_ref,
                     wsrc_ref, bsrc_ref, wtgt_ref, btgt_ref,
                     wout_tgt_ref, wout_upd_ref, bout_ref,
                     *refs, num_head, dh_pad, with_scores):
    if with_scores:
        out_ref, scores_ref, q_scr, kv_scr, upd_scr = refs
    else:
        out_ref, q_scr, kv_scr, upd_scr = refs
        scores_ref = None

    Bb, Ns, S = src_ref.shape
    _, Nt, T = tgt_ref.shape
    Hd = num_head * dh_pad

    # Fold the batch block into the sublane axis so the projections run as
    # single (Bb*N, D) MXU matmuls (bf16 operands, f32 accumulation).
    src2 = src_ref[...].reshape(Bb * Ns, S)
    tgt2 = tgt_ref[...].reshape(Bb * Nt, T)

    src_trans = jnp.dot(src2, wsrc_ref[...], preferred_element_type=jnp.float32)
    src_trans = src_trans + bsrc_ref[...]
    tgt_trans = jnp.dot(tgt2, wtgt_ref[...], preferred_element_type=jnp.float32)
    tgt_trans = tgt_trans + btgt_ref[...]          # 1/sqrt(dh) already folded in

    # APPLY_MASK on the query side only.  The source-side column mask is
    # mathematically redundant: masked key columns get -inf scores before
    # softmax, so masked value rows receive exactly zero weight (perf review).
    tgt_trans = tgt_trans * tmask_col_ref[...].reshape(Bb * Nt, 1)

    # Park the projections in bf16 VMEM scratch so the per-head vreg live set
    # is just scores / exp / probs / upd (bounded live ranges, perf review).
    q_scr[...] = tgt_trans.astype(jnp.bfloat16)
    kv_scr[...] = src_trans.astype(jnp.bfloat16)

    # Hoist the key mask out of the head loop (JAX does not CSE broadcasts).
    key_mask = jnp.broadcast_to(smask_row_ref[...] == 0.0, (Bb, Nt, Ns))
    neg_inf = jnp.float32(-jnp.inf)

    for h in range(num_head):                      # num_head is small & static
        lo, hi = h * dh_pad, (h + 1) * dh_pad      # 128-lane aligned slices
        q = q_scr[:, lo:hi].reshape(Bb, Nt, dh_pad)
        k = kv_scr[:, lo:hi].reshape(Bb, Ns, dh_pad)
        v = kv_scr[:, Hd + lo:Hd + hi].reshape(Bb, Ns, dh_pad)

        # Batched score matmul contracting on the last dims (no k.T relayout).
        scores = jnp.einsum("bqd,bkd->bqk", q, k,
                            preferred_element_type=jnp.float32)   # (Bb,Nt,Ns)
        scores = jnp.where(key_mask, neg_inf, scores)

        m = jnp.max(scores, axis=-1, keepdims=True)
        e = jnp.exp(scores - m)
        p = e * pl.reciprocal(jnp.sum(e, axis=-1, keepdims=True), approx=True)

        upd = jnp.einsum("bqk,bkd->bqd", p.astype(jnp.bfloat16), v,
                         preferred_element_type=jnp.float32)      # (Bb,Nt,dh_pad)
        # Per-head updates land head-major in VMEM scratch; ONE big output
        # projection runs after the loop (no K=dh mini-matmuls).
        upd_scr[:, lo:hi] = upd.reshape(Bb * Nt, dh_pad).astype(jnp.bfloat16)

        if with_scores and h == num_head - 1:
            # The PyTorch module returns the LAST head's masked, pre-softmax
            # scores (masked_fill_ is in-place).
            scores_ref[...] = scores.astype(scores_ref.dtype)

    # out = tgt @ w_out[:T] + concat_h(upd_h) @ w_out[T:] + b_out
    out = jnp.dot(tgt2, wout_tgt_ref[...], preferred_element_type=jnp.float32)
    out = out + jnp.dot(upd_scr[...], wout_upd_ref[...],
                        preferred_element_type=jnp.float32)
    out = out + bout_ref[...]
    out_ref[...] = out.reshape(Bb, Nt, out.shape[-1]).astype(out_ref.dtype)


def one_side_inter_modality_update(src, tgt, src_mask, tgt_mask, prepared, num_head,
                                   *, batch_block=8, min_grid_steps=1,
                                   target_step_bytes=24 * 1024 * 1024,
                                   out_dtype=jnp.float32, with_scores=True,
                                   score_dtype=jnp.float32):
    B, Ns, S = src.shape
    _, Nt, T = tgt.shape
    O = prepared["output_size"]
    O_pad = prepared["output_size_padded"]
    dh_pad = prepared["dh_pad"]
    Hd = num_head * dh_pad

    # Lane-dense layout: scores' lane dim (Ns) padded to a multiple of 128,
    # Nt padded to a sublane multiple of 8.
    Ns_pad = _round_up(Ns, 128)
    Nt_pad = _round_up(Nt, 8)

    out_isz = jnp.dtype(out_dtype).itemsize
    sc_isz = jnp.dtype(score_dtype).itemsize

    def _step_bytes(bb):
        inp = bb * Ns_pad * S * 2 + bb * Nt_pad * T * 2 + bb * Ns_pad * 4 + bb * Nt_pad * 4
        outb = bb * Nt_pad * O_pad * out_isz
        if with_scores:
            outb += bb * Nt_pad * Ns_pad * sc_isz
        wts = (S * 2 * Hd + T * Hd + T * O_pad + Hd * O_pad) * 2 \
              + (2 * Hd + Hd + O_pad) * 4
        scratch = 2 * bb * Nt_pad * Hd * 2 + bb * Ns_pad * 2 * Hd * 2
        # inputs / outputs / weights are double-buffered by the pipeline
        return 2 * (inp + outb + wts) + scratch

    # Pick the biggest batch block whose per-step footprint stays v7x-safe
    # (64 MiB physical / 32 MiB scoped).  v6e users can raise batch_block and
    # target_step_bytes to run bigger MXU slabs out of its 128 MiB VMEM.
    Bb = max(1, min(batch_block, B))
    while Bb > 1 and _step_bytes(Bb) > target_step_bytes:
        Bb //= 2
    # v7x megacore: keep at least `min_grid_steps` parallel grid steps alive.
    while Bb > 1 and -(-B // Bb) < min_grid_steps:
        Bb //= 2
    B_pad = _round_up(B, Bb)
    vmem_limit = int(min(max(2 * _step_bytes(Bb) + (4 << 20), 32 << 20), 100 << 20))

    src_p = _pad_axis(_pad_axis(src, 1, Ns_pad), 0, B_pad).astype(jnp.bfloat16)
    tgt_p = _pad_axis(_pad_axis(tgt, 1, Nt_pad), 0, B_pad).astype(jnp.bfloat16)

    smask = _pad_axis(_pad_axis(src_mask.astype(jnp.float32), 1, Ns_pad), 0, B_pad)
    tmask = _pad_axis(_pad_axis(tgt_mask.astype(jnp.float32), 1, Nt_pad), 0, B_pad)
    if B_pad > B:
        # Keep one "valid" source position in padded batch rows so discarded
        # rows don't hit the all -inf -> NaN softmax path.
        # TODO(synk): a *real* batch row with an all-zero src_mask produces NaN
        # here exactly as the PyTorch module does.
        smask = smask.at[B:, 0].set(1.0)

    smask_row = smask[:, None, :]      # (B_pad, 1, Ns_pad)
    tmask_col = tmask[:, :, None]      # (B_pad, Nt_pad, 1)

    kernel = functools.partial(_one_side_kernel, num_head=num_head,
                               dh_pad=dh_pad, with_scores=with_scores)

    batched3 = lambda shape: pl.BlockSpec(shape, lambda b: (b, 0, 0))
    shared2 = lambda shape: pl.BlockSpec(shape, lambda b: (0, 0))

    out_struct = jax.ShapeDtypeStruct((B_pad, Nt_pad, O_pad), out_dtype)
    out_spec = batched3((Bb, Nt_pad, O_pad))
    if with_scores:
        out_shape = (out_struct,
                     jax.ShapeDtypeStruct((B_pad, Nt_pad, Ns_pad), score_dtype))
        out_specs = (out_spec, batched3((Bb, Nt_pad, Ns_pad)))
    else:
        out_shape = out_struct
        out_specs = out_spec

    res = pl.pallas_call(
        kernel,
        out_shape=out_shape,
        grid=(B_pad // Bb,),
        in_specs=[
            batched3((Bb, Ns_pad, S)),           # src (bf16)
            batched3((Bb, Nt_pad, T)),           # tgt (bf16)
            batched3((Bb, 1, Ns_pad)),           # src_mask row (f32)
            batched3((Bb, Nt_pad, 1)),           # tgt_mask col (f32)
            shared2((S, 2 * Hd)),                # w_src (head-padded, bf16)
            shared2((1, 2 * Hd)),                # b_src
            shared2((T, Hd)),                    # w_tgt (scale folded, head-padded)
            shared2((1, Hd)),                    # b_tgt
            shared2((T, O_pad)),                 # w_out tgt half (lane-padded)
            shared2((Hd, O_pad)),                # w_out update half (head-padded rows)
            shared2((1, O_pad)),                 # b_out (lane-padded)
        ],
        out_specs=out_specs,
        scratch_shapes=[
            pltpu.VMEM((Bb * Nt_pad, Hd), jnp.bfloat16),      # queries
            pltpu.VMEM((Bb * Ns_pad, 2 * Hd), jnp.bfloat16),  # keys | values
            pltpu.VMEM((Bb * Nt_pad, Hd), jnp.bfloat16),      # per-head updates
        ],
        compiler_params=pltpu.CompilerParams(
            dimension_semantics=("parallel",),
            vmem_limit_bytes=vmem_limit,
        ),
        # TODO(synk): for production Nt, add an Nt-tile ("parallel") grid axis so
        # v7x's second TensorCore is fed even at tiny batch sizes.
    )(src_p, tgt_p, smask_row, tmask_col,
      prepared["w_src"], prepared["b_src"],
      prepared["w_tgt"], prepared["b_tgt"],
      prepared["w_out_tgt"], prepared["w_out_upd"], prepared["b_out"])

    if with_scores:
        out_p, scores_p = res
        return out_p[:B, :Nt, :O], scores_p[:B, :Nt, :Ns]
    return res[:B, :Nt, :O], None


def one_side_reference(src, tgt, src_mask, tgt_mask, params, num_head):
    """Pure-JAX f32 reference mirroring the PyTorch forward."""
    O = params["w_tgt"].shape[1]
    src_trans = src @ params["w_src"] + params["b_src"]
    tgt_trans = tgt @ params["w_tgt"] + params["b_tgt"]
    src_trans = src_trans * src_mask[:, :, None]
    tgt_trans = tgt_trans * tgt_mask[:, :, None]
    src_key, src_val = src_trans[..., :O], src_trans[..., O:]
    dh = O // num_head
    scale = 1.0 / math.sqrt(dh)
    updates, s = [], None
    for h in range(num_head):
        q = tgt_trans[..., h * dh:(h + 1) * dh]
        k = src_key[..., h * dh:(h + 1) * dh]
        v = src_val[..., h * dh:(h + 1) * dh]
        s = jnp.einsum("btd,bsd->bts", q, k) * scale
        s = jnp.where(src_mask[:, None, :] == 0, -jnp.inf, s)
        p = jax.nn.softmax(s, axis=-1)
        updates.append(jnp.einsum("bts,bsd->btd", p, v))
    tgt_update = jnp.concatenate(updates, axis=-1)
    cat_tgt = jnp.concatenate([tgt, tgt_update], axis=-1)
    out = cat_tgt @ params["w_out"] + params["b_out"]
    return out, s


if __name__ == "__main__":
    key = jax.random.PRNGKey(0)
    ks = jax.random.split(key, 16)

    # ---------------- Part 1: TimeReasoningCell ----------------
    B, Tt, K = 2, 8, 32
    logits = jax.random.normal(ks[8], (B, Tt, K), jnp.float32)
    minf = jax.random.bernoulli(ks[9], 0.15, (B, Tt, K))
    logits = jnp.where(minf, -jnp.inf, logits)
    logits = logits.at[0, 3, :].set(-jnp.inf)   # row whose cleaned sum is exactly 0

    z_ref = time_reasoning_cell_ref(logits)

    # Auto dispatch: tiny shape -> fused pure-JAX path (perf review).
    z_auto = time_reasoning_cell(logits)
    jax.block_until_ready(z_auto["z"])
    assert np.allclose(np.asarray(z_auto["z"]), np.asarray(z_ref["z"]), atol=1e-5, rtol=1e-5)

    # Forced Pallas path at the same shape.
    z_pal = time_reasoning_cell(logits, force_pallas=True)
    jax.block_until_ready(z_pal["z"])
    assert np.allclose(np.asarray(z_pal["z"]), np.asarray(z_ref["z"]), atol=1e-5, rtol=1e-5)
    assert np.allclose(np.asarray(z_pal["z_back"]), np.asarray(z_ref["z_back"]), atol=1e-5, rtol=1e-5)

    # Batch-tiled Pallas path (grid > 1) at a production-ish shape.
    B3, T3, K3 = 16, 48, 128
    big = jax.random.normal(ks[10], (B3, T3, K3), jnp.float32)
    big = jnp.where(jax.random.bernoulli(ks[11], 0.1, (B3, T3, K3)), -jnp.inf, big)
    zb = time_reasoning_cell(big)
    jax.block_until_ready(zb["z"])
    zb_ref = time_reasoning_cell_ref(big)
    assert np.allclose(np.asarray(zb["z"]), np.asarray(zb_ref["z"]), atol=1e-4, rtol=1e-4)

    # ---------------- Part 2: OneSideInterModalityUpdate ----------------
    B2, Ns, Nt = 2, 16, 8
    src_size, tgt_size, output_size, num_head = 32, 32, 32, 4

    src = jax.random.normal(ks[0], (B2, Ns, src_size), jnp.float32)
    tgt = jax.random.normal(ks[1], (B2, Nt, tgt_size), jnp.float32)

    src_lens = jnp.array([12, 16])
    tgt_lens = jnp.array([8, 6])
    src_mask = (jnp.arange(Ns)[None, :] < src_lens[:, None]).astype(jnp.float32)
    tgt_mask = (jnp.arange(Nt)[None, :] < tgt_lens[:, None]).astype(jnp.float32)

    params = {
        "w_src": 0.1 * jax.random.normal(ks[2], (src_size, 2 * output_size), jnp.float32),
        "b_src": 0.1 * jax.random.normal(ks[3], (1, 2 * output_size), jnp.float32),
        "w_tgt": 0.1 * jax.random.normal(ks[4], (tgt_size, output_size), jnp.float32),
        "b_tgt": 0.1 * jax.random.normal(ks[5], (1, output_size), jnp.float32),
        "w_out": 0.1 * jax.random.normal(ks[6], (tgt_size + output_size, output_size), jnp.float32),
        "b_out": 0.1 * jax.random.normal(ks[7], (1, output_size), jnp.float32),
    }

    prepared = prepare_params(params, num_head)
    update_tgt, src2tgt = one_side_inter_modality_update(
        src, tgt, src_mask, tgt_mask, prepared, num_head)
    jax.block_until_ready(update_tgt)
    jax.block_until_ready(src2tgt)

    ref_out, ref_scores = one_side_reference(src, tgt, src_mask, tgt_mask, params, num_head)
    # bf16 MXU operands + approximate EUP reciprocal -> loose tolerance.
    assert np.allclose(np.asarray(update_tgt), np.asarray(ref_out), atol=3e-2, rtol=3e-2)
    assert np.allclose(np.asarray(src2tgt), np.asarray(ref_scores), atol=3e-2, rtol=3e-2)

    print("KERNEL_OK")
</pallas_src>

<mosaic_0001>
module attributes {stable_mosaic.version = 11 : i64} {
  func.func @_time_reasoning_kernel(%arg0: i32, %arg1: memref<2x128x32xf32, #tpu.memory_space<vmem>>, %arg2: memref<2x128xf32, #tpu.memory_space<vmem>>) attributes {dimension_semantics = [#tpu.dimension_semantics<parallel>], iteration_bounds = array<i64: 1>, scalar_prefetch = 0 : i64, scratch_operands = 0 : i64, tpu.core_type = #tpu.core_type<tc>, window_params = [{transform_indices = @transform_0, window_bounds = array<i64: 2, 128, 32>}, {transform_indices = @transform_1, window_bounds = array<i64: 2, 128>}]} {
    %c0 = arith.constant 0 : index
    %c0_0 = arith.constant 0 : index
    %c0_1 = arith.constant 0 : index
    %0 = vector.load %arg1[%c0, %c0_0, %c0_1] : memref<2x128x32xf32, #tpu.memory_space<vmem>>, vector<2x128x32xf32>
    %cst = arith.constant 0xFF800000 : f32
    %1 = vector.broadcast %cst : f32 to vector<2x128x32xf32>
    %2 = arith.cmpf oeq, %0, %1 : vector<2x128x32xf32>
    %cst_2 = arith.constant 0.000000e+00 : f32
    %3 = vector.broadcast %cst_2 : f32 to vector<2x128x32xf32>
    %4 = arith.select %2, %3, %0 : vector<2x128x32xi1>, vector<2x128x32xf32>
    %cst_3 = arith.constant dense<0.000000e+00> : vector<2x128xf32>
    %5 = vector.multi_reduction <add>, %4, %cst_3 [2] : vector<2x128x32xf32> to vector<2x128xf32>
    %cst_4 = arith.constant 0.000000e+00 : f32
    %6 = vector.broadcast %cst_4 : f32 to vector<2x128xf32>
    %7 = arith.cmpf oeq, %5, %6 : vector<2x128xf32>
    %cst_5 = arith.constant -1.000000e+03 : f32
    %8 = vector.broadcast %cst_5 : f32 to vector<2x128xf32>
    %9 = arith.select %7, %8, %5 : vector<2x128xi1>, vector<2x128xf32>
    %c0_6 = arith.constant 0 : index
    %c0_7 = arith.constant 0 : index
    %10 = vector.load %arg2[%c0_6, %c0_7] : memref<2x128xf32, #tpu.memory_space<vmem>>, vector<2x128xf32>
    tpu.vector_store %arg2[%c0_6, %c0_7], %9 {strides = array<i32>} : memref<2x128xf32, #tpu.memory_space<vmem>>, vector<2x128xf32>,
    return
  }
  func.func @transform_0(%arg0: i32) -> (i32, i32, i32) {
    %c0_i32 = arith.constant 0 : i32
    %c0_i32_0 = arith.constant 0 : i32
    %c0_i32_1 = arith.constant 0 : i32
    return %arg0, %c0_i32, %c0_i32_0 : i32, i32, i32
  }
  func.func @transform_1(%arg0: i32) -> (i32, i32) {
    %c0_i32 = arith.constant 0 : i32
    %c0_i32_0 = arith.constant 0 : i32
    return %arg0, %c0_i32 : i32, i32
  }
}

</mosaic_0001>

<llo_original>
// kernel: tpu_custom_call.1
$region0: #{tpu_custom_call.1}
  #allocation0 [shape = 'u32[]', space=smem, size = 0x4, offset = 0x4, fixed_abs, tag = 'smem constant byte address 0x4 - core index']
  #allocation1 [shape = 'u32[144,128]{1,0:T(1,128)}', space=vmem, size = 0x12000, scoped, tag = 'internal scratch']
  %s0 = inlined_call_operand.vmem [shape: f32[2,128,32], index: 0, kind: input, shape index: {}]
  %s1 = inlined_call_operand.hbm [shape: f32[2,128], index: 1, kind: output, shape index: {}]
  %s2 = sld [smem:[#allocation0]]
  $region14: #{tpu_custom_call.1} parent=0
    _
  %s4 = ssub.s32 1, %s2
  %s5 = scalar_select 0, %s4, %s2
  $region1: #{tpu_custom_call.1} parent=0
    #allocation2 [shape = 'u8[1024]{0}', space=vmem, size = 0x400, scoped, tag = 'output window, operand 0, single buffered']
    #allocation3 [shape = 's32[1]{0}', space=sflag, size = 0x4, scoped, tag = 'scoped memory for tpu_custom_call.1']
    %6 = vsyncpa [#allocation3], 0
    // Predicated region
    $region2: #{tpu_custom_call.1} parent=1 // pred_check
      _
    $region3: #{tpu_custom_call.1} parent=1 // pred_check_branch
      %8 = sbr.rel (0) target = $region5
    $region4: #{tpu_custom_call.1} parent=1 // pred_region
      _
    $region5: #{tpu_custom_call.1} parent=1 // pred_fallthru
      _
    %v9 = vld [vmem:[%s0] sm:$0xff]
    %v10 = vld [vmem:[%s0 + $0x8] sm:$0xff]
    %v11 = vld [vmem:[%s0 + $0x10] sm:$0xff]
    %v12 = vld [vmem:[%s0 + $0x18] sm:$0xff]
    %v13 = vld [vmem:[%s0 + $0x20] sm:$0xff]
    %v14 = vld [vmem:[%s0 + $0x28] sm:$0xff]
    %v15 = vld [vmem:[%s0 + $0x30] sm:$0xff]
    %v16 = vld [vmem:[%s0 + $0x38] sm:$0xff]
    %v17 = vld [vmem:[%s0 + $0x40] sm:$0xff]
    %v18 = vld [vmem:[%s0 + $0x48] sm:$0xff]
    %v19 = vld [vmem:[%s0 + $0x50] sm:$0xff]
    %v20 = vld [vmem:[%s0 + $0x58] sm:$0xff]
    %v21 = vld [vmem:[%s0 + $0x60] sm:$0xff]
    %v22 = vld [vmem:[%s0 + $0x68] sm:$0xff]
    %v23 = vld [vmem:[%s0 + $0x70] sm:$0xff]
    %v24 = vld [vmem:[%s0 + $0x78] sm:$0xff]
    %v25 = vld [vmem:[%s0 + $0x80] sm:$0xff]
    %v26 = vld [vmem:[%s0 + $0x88] sm:$0xff]
    %v27 = vld [vmem:[%s0 + $0x90] sm:$0xff]
    %v28 = vld [vmem:[%s0 + $0x98] sm:$0xff]
    %v29 = vld [vmem:[%s0 + $0xa0] sm:$0xff]
    %v30 = vld [vmem:[%s0 + $0xa8] sm:$0xff]
    %v31 = vld [vmem:[%s0 + $0xb0] sm:$0xff]
    %v32 = vld [vmem:[%s0 + $0xb8] sm:$0xff]
    %v33 = vld [vmem:[%s0 + $0xc0] sm:$0xff]
    %v34 = vld [vmem:[%s0 + $0xc8] sm:$0xff]
    %v35 = vld [vmem:[%s0 + $0xd0] sm:$0xff]
    %v36 = vld [vmem:[%s0 + $0xd8] sm:$0xff]
    %v37 = vld [vmem:[%s0 + $0xe0] sm:$0xff]
    %v38 = vld [vmem:[%s0 + $0xe8] sm:$0xff]
    %v39 = vld [vmem:[%s0 + $0xf0] sm:$0xff]
    %v40 = vld [vmem:[%s0 + $0xf8] sm:$0xff]
    %vm41 = vcmp.eq.f32.partialorder %v9, -inf
    %vm42 = vcmp.eq.f32.partialorder %v10, -inf
    %vm43 = vcmp.eq.f32.partialorder %v11, -inf
    %vm44 = vcmp.eq.f32.partialorder %v12, -inf
    %vm45 = vcmp.eq.f32.partialorder %v13, -inf
    %vm46 = vcmp.eq.f32.partialorder %v14, -inf
    %vm47 = vcmp.eq.f32.partialorder %v15, -inf
    %vm48 = vcmp.eq.f32.partialorder %v16, -inf
    %vm49 = vcmp.eq.f32.partialorder %v17, -inf
    %vm50 = vcmp.eq.f32.partialorder %v18, -inf
    %vm51 = vcmp.eq.f32.partialorder %v19, -inf
    %vm52 = vcmp.eq.f32.partialorder %v20, -inf
    %vm53 = vcmp.eq.f32.partialorder %v21, -inf
    %vm54 = vcmp.eq.f32.partialorder %v22, -inf
    %vm55 = vcmp.eq.f32.partialorder %v23, -inf
    %vm56 = vcmp.eq.f32.partialorder %v24, -inf
    %vm57 = vcmp.eq.f32.partialorder %v25, -inf
    %vm58 = vcmp.eq.f32.partialorder %v26, -inf
    %vm59 = vcmp.eq.f32.partialorder %v27, -inf
    %vm60 = vcmp.eq.f32.partialorder %v28, -inf
    %vm61 = vcmp.eq.f32.partialorder %v29, -inf
    %vm62 = vcmp.eq.f32.partialorder %v30, -inf
    %vm63 = vcmp.eq.f32.partialorder %v31, -inf
    %vm64 = vcmp.eq.f32.partialorder %v32, -inf
    %vm65 = vcmp.eq.f32.partialorder %v33, -inf
    %vm66 = vcmp.eq.f32.partialorder %v34, -inf
    %vm67 = vcmp.eq.f32.partialorder %v35, -inf
    %vm68 = vcmp.eq.f32.partialorder %v36, -inf
    %vm69 = vcmp.eq.f32.partialorder %v37, -inf
    %vm70 = vcmp.eq.f32.partialorder %v38, -inf
    %vm71 = vcmp.eq.f32.partialorder %v39, -inf
    %vm72 = vcmp.eq.f32.partialorder %v40, -inf
    %v73 = vsel %vm41, 0.0, %v9
    %v74 = vsel %vm42, 0.0, %v10
    %v75 = vsel %vm43, 0.0, %v11
    %v76 = vsel %vm44, 0.0, %v12
    %v77 = vsel %vm45, 0.0, %v13
    %v78 = vsel %vm46, 0.0, %v14
    %v79 = vsel %vm47, 0.0, %v15
    %v80 = vsel %vm48, 0.0, %v16
    %v81 = vsel %vm49, 0.0, %v17
    %v82 = vsel %vm50, 0.0, %v18
    %v83 = vsel %vm51, 0.0, %v19
    %v84 = vsel %vm52, 0.0, %v20
    %v85 = vsel %vm53, 0.0, %v21
    %v86 = vsel %vm54, 0.0, %v22
    %v87 = vsel %vm55, 0.0, %v23
    %v88 = vsel %vm56, 0.0, %v24
    %v89 = vsel %vm57, 0.0, %v25
    %v90 = vsel %vm58, 0.0, %v26
    %v91 = vsel %vm59, 0.0, %v27
    %v92 = vsel %vm60, 0.0, %v28
    %v93 = vsel %vm61, 0.0, %v29
    %v94 = vsel %vm62, 0.0, %v30
    %v95 = vsel %vm63, 0.0, %v31
    %v96 = vsel %vm64, 0.0, %v32
    %v97 = vsel %vm65, 0.0, %v33
    %v98 = vsel %vm66, 0.0, %v34
    %v99 = vsel %vm67, 0.0, %v35
    %v100 = vsel %vm68, 0.0, %v36
    %v101 = vsel %vm69, 0.0, %v37
    %v102 = vsel %vm70, 0.0, %v38
    %v103 = vsel %vm71, 0.0, %v39
    %v104 = vsel %vm72, 0.0, %v40
    %vm105 = vcmask 261120
    %v106 = vsel %vm105, %v73, 0.0
    %107 = vadd.xlane.f32.xlu0 %v106
    %v108 = vpop.xlane.xlu0 %107
    %v109 = vsel %vm105, %v74, 0.0
    %110 = vadd.xlane.f32.xlu0 %v109
    %v111 = vpop.xlane.xlu0 %110
    %v112 = vsel %vm105, %v75, 0.0
    %113 = vadd.xlane.f32.xlu0 %v112
    %v114 = vpop.xlane.xlu0 %113
    %v115 = vsel %vm105, %v76, 0.0
    %116 = vadd.xlane.f32.xlu0 %v115
    %v117 = vpop.xlane.xlu0 %116
    %v118 = vsel %vm105, %v77, 0.0
    %119 = vadd.xlane.f32.xlu0 %v118
    %v120 = vpop.xlane.xlu0 %119
    %v121 = vsel %vm105, %v78, 0.0
    %122 = vadd.xlane.f32.xlu0 %v121
    %v123 = vpop.xlane.xlu0 %122
    %v124 = vsel %vm105, %v79, 0.0
    %125 = vadd.xlane.f32.xlu0 %v124
    %v126 = vpop.xlane.xlu0 %125
    %v127 = vsel %vm105, %v80, 0.0
    %128 = vadd.xlane.f32.xlu0 %v127
    %v129 = vpop.xlane.xlu0 %128
    %v130 = vsel %vm105, %v81, 0.0
    %131 = vadd.xlane.f32.xlu0 %v130
    %v132 = vpop.xlane.xlu0 %131
    %v133 = vsel %vm105, %v82, 0.0
    %134 = vadd.xlane.f32.xlu0 %v133
    %v135 = vpop.xlane.xlu0 %134
    %v136 = vsel %vm105, %v83, 0.0
    %137 = vadd.xlane.f32.xlu0 %v136
    %v138 = vpop.xlane.xlu0 %137
    %v139 = vsel %vm105, %v84, 0.0
    %140 = vadd.xlane.f32.xlu0 %v139
    %v141 = vpop.xlane.xlu0 %140
    %v142 = vsel %vm105, %v85, 0.0
    %143 = vadd.xlane.f32.xlu0 %v142
    %v144 = vpop.xlane.xlu0 %143
    %v145 = vsel %vm105, %v86, 0.0
    %146 = vadd.xlane.f32.xlu0 %v145
    %v147 = vpop.xlane.xlu0 %146
    %v148 = vsel %vm105, %v87, 0.0
    %149 = vadd.xlane.f32.xlu0 %v148
    %v150 = vpop.xlane.xlu0 %149
    %v151 = vsel %vm105, %v88, 0.0
    %152 = vadd.xlane.f32.xlu0 %v151
    %v153 = vpop.xlane.xlu0 %152
    %v154 = vsel %vm105, %v89, 0.0
    %155 = vadd.xlane.f32.xlu0 %v154
    %v156 = vpop.xlane.xlu0 %155
    %v157 = vsel %vm105, %v90, 0.0
    %158 = vadd.xlane.f32.xlu0 %v157
    %v159 = vpop.xlane.xlu0 %158
    %v160 = vsel %vm105, %v91, 0.0
    %161 = vadd.xlane.f32.xlu0 %v160
    %v162 = vpop.xlane.xlu0 %161
    %v163 = vsel %vm105, %v92, 0.0
    %164 = vadd.xlane.f32.xlu0 %v163
    %v165 = vpop.xlane.xlu0 %164
    %v166 = vsel %vm105, %v93, 0.0
    %167 = vadd.xlane.f32.xlu0 %v166
    %v168 = vpop.xlane.xlu0 %167
    %v169 = vsel %vm105, %v94, 0.0
    %170 = vadd.xlane.f32.xlu0 %v169
    %v171 = vpop.xlane.xlu0 %170
    %v172 = vsel %vm105, %v95, 0.0
    %173 = vadd.xlane.f32.xlu0 %v172
    %v174 = vpop.xlane.xlu0 %173
    %v175 = vsel %vm105, %v96, 0.0
    %176 = vadd.xlane.f32.xlu0 %v175
    %v177 = vpop.xlane.xlu0 %176
    %v178 = vsel %vm105, %v97, 0.0
    %179 = vadd.xlane.f32.xlu0 %v178
    %v180 = vpop.xlane.xlu0 %179
    %v181 = vsel %vm105, %v98, 0.0
    %182 = vadd.xlane.f32.xlu0 %v181
    %v183 = vpop.xlane.xlu0 %182
    %v184 = vsel %vm105, %v99, 0.0
    %185 = vadd.xlane.f32.xlu0 %v184
    %v186 = vpop.xlane.xlu0 %185
    %v187 = vsel %vm105, %v100, 0.0
    %188 = vadd.xlane.f32.xlu0 %v187
    %v189 = vpop.xlane.xlu0 %188
    %v190 = vsel %vm105, %v101, 0.0
    %191 = vadd.xlane.f32.xlu0 %v190
    %v192 = vpop.xlane.xlu0 %191
    %v193 = vsel %vm105, %v102, 0.0
    %194 = vadd.xlane.f32.xlu0 %v193
    %v195 = vpop.xlane.xlu0 %194
    %v196 = vsel %vm105, %v103, 0.0
    %197 = vadd.xlane.f32.xlu0 %v196
    %v198 = vpop.xlane.xlu0 %197
    %v199 = vsel %vm105, %v104, 0.0
    %200 = vadd.xlane.f32.xlu0 %v199
    %v201 = vpop.xlane.xlu0 %200
    %vm202 = vcmp.eq.f32.partialorder %v108, 0.0
    %vm203 = vcmp.eq.f32.partialorder %v111, 0.0
    %vm204 = vcmp.eq.f32.partialorder %v114, 0.0
    %vm205 = vcmp.eq.f32.partialorder %v117, 0.0
    %vm206 = vcmp.eq.f32.partialorder %v120, 0.0
    %vm207 = vcmp.eq.f32.partialorder %v123, 0.0
    %vm208 = vcmp.eq.f32.partialorder %v126, 0.0
    %vm209 = vcmp.eq.f32.partialorder %v129, 0.0
    %vm210 = vcmp.eq.f32.partialorder %v132, 0.0
    %vm211 = vcmp.eq.f32.partialorder %v135, 0.0
    %vm212 = vcmp.eq.f32.partialorder %v138, 0.0
    %vm213 = vcmp.eq.f32.partialorder %v141, 0.0
    %vm214 = vcmp.eq.f32.partialorder %v144, 0.0
    %vm215 = vcmp.eq.f32.partialorder %v147, 0.0
    %vm216 = vcmp.eq.f32.partialorder %v150, 0.0
    %vm217 = vcmp.eq.f32.partialorder %v153, 0.0
    %vm218 = vcmp.eq.f32.partialorder %v156, 0.0
    %vm219 = vcmp.eq.f32.partialorder %v159, 0.0
    %vm220 = vcmp.eq.f32.partialorder %v162, 0.0
    %vm221 = vcmp.eq.f32.partialorder %v165, 0.0
    %vm222 = vcmp.eq.f32.partialorder %v168, 0.0
    %vm223 = vcmp.eq.f32.partialorder %v171, 0.0
    %vm224 = vcmp.eq.f32.partialorder %v174, 0.0
    %vm225 = vcmp.eq.f32.partialorder %v177, 0.0
    %vm226 = vcmp.eq.f32.partialorder %v180, 0.0
    %vm227 = vcmp.eq.f32.partialorder %v183, 0.0
    %vm228 = vcmp.eq.f32.partialorder %v186, 0.0
    %vm229 = vcmp.eq.f32.partialorder %v189, 0.0
    %vm230 = vcmp.eq.f32.partialorder %v192, 0.0
    %vm231 = vcmp.eq.f32.partialorder %v195, 0.0
    %vm232 = vcmp.eq.f32.partialorder %v198, 0.0
    %vm233 = vcmp.eq.f32.partialorder %v201, 0.0
    %v234 = vsel %vm202, -1000.0, %v108
    %v235 = vsel %vm203, -1000.0, %v111
    %v236 = vsel %vm204, -1000.0, %v114
    %v237 = vsel %vm205, -1000.0, %v117
    %v238 = vsel %vm206, -1000.0, %v120
    %v239 = vsel %vm207, -1000.0, %v123
    %v240 = vsel %vm208, -1000.0, %v126
    %v241 = vsel %vm209, -1000.0, %v129
    %v242 = vsel %vm210, -1000.0, %v132
    %v243 = vsel %vm211, -1000.0, %v135
    %v244 = vsel %vm212, -1000.0, %v138
    %v245 = vsel %vm213, -1000.0, %v141
    %v246 = vsel %vm214, -1000.0, %v144
    %v247 = vsel %vm215, -1000.0, %v147
    %v248 = vsel %vm216, -1000.0, %v150
    %v249 = vsel %vm217, -1000.0, %v153
    %v250 = vsel %vm218, -1000.0, %v156
    %v251 = vsel %vm219, -1000.0, %v159
    %v252 = vsel %vm220, -1000.0, %v162
    %v253 = vsel %vm221, -1000.0, %v165
    %v254 = vsel %vm222, -1000.0, %v168
    %v255 = vsel %vm223, -1000.0, %v171
    %v256 = vsel %vm224, -1000.0, %v174
    %v257 = vsel %vm225, -1000.0, %v177
    %v258 = vsel %vm226, -1000.0, %v180
    %v259 = vsel %vm227, -1000.0, %v183
    %v260 = vsel %vm228, -1000.0, %v186
    %v261 = vsel %vm229, -1000.0, %v189
    %v262 = vsel %vm230, -1000.0, %v192
    %v263 = vsel %vm231, -1000.0, %v195
    %v264 = vsel %vm232, -1000.0, %v198
    %v265 = vsel %vm233, -1000.0, %v201
    %v298 = vlaneseq
    %v299 = vand.u32 %v298, 127
    %v300 = vlaneseq
    %v301 = vshrl.u32 %v300, 7
    %v302 = vsub.s32 %v299, %v301
    %v303 = vrot.slane %v234, %v302
    %v304 = vadd.s32 %v299, 4294967288
    %v305 = vlaneseq
    %v306 = vshrl.u32 %v305, 7
    %v307 = vsub.s32 %v304, %v306
    %v308 = vrot.slane %v235, %v307
    %vm309 = vcmask 130112
    %v310 = vsel %vm309, %v308, %v303
    %v311 = vadd.s32 %v299, 4294967280
    %v312 = vlaneseq
    %v313 = vshrl.u32 %v312, 7
    %v314 = vsub.s32 %v311, %v313
    %v315 = vrot.slane %v236, %v314
    %vm316 = vcmask 195712
    %v317 = vsel %vm316, %v315, %v310
    %v318 = vadd.s32 %v299, 4294967272
    %v319 = vlaneseq
    %v320 = vshrl.u32 %v319, 7
    %v321 = vsub.s32 %v318, %v320
    %v322 = vrot.slane %v237, %v321
    %vm323 = vcmask 261312
    %v324 = vsel %vm323, %v322, %v317
    %v325 = vadd.s32 %v299, 4294967264
    %v326 = vlaneseq
    %v327 = vshrl.u32 %v326, 7
    %v328 = vsub.s32 %v325, %v327
    %v329 = vrot.slane %v238, %v328
    %vm330 = vcmask 326912
    %v331 = vsel %vm330, %v329, %v324
    %v332 = vadd.s32 %v299, 4294967256
    %v333 = vlaneseq
    %v334 = vshrl.u32 %v333, 7
    %v335 = vsub.s32 %v332, %v334
    %v336 = vrot.slane %v239, %v335
    %vm337 = vcmask 392512
    %v338 = vsel %vm337, %v336, %v331
    %v339 = vadd.s32 %v299, 4294967248
    %v340 = vlaneseq
    %v341 = vshrl.u32 %v340, 7
    %v342 = vsub.s32 %v339, %v341
    %v343 = vrot.slane %v240, %v342
    %vm344 = vcmask 458112
    %v345 = vsel %vm344, %v343, %v338
    %v346 = vadd.s32 %v299, 4294967240
    %v347 = vlaneseq
    %v348 = vshrl.u32 %v347, 7
    %v349 = vsub.s32 %v346, %v348
    %v350 = vrot.slane %v241, %v349
    %vm351 = vcmask 523712
    %v352 = vsel %vm351, %v350, %v345
    %v353 = vadd.s32 %v299, 4294967232
    %v354 = vlaneseq
    %v355 = vshrl.u32 %v354, 7
    %v356 = vsub.s32 %v353, %v355
    %v357 = vrot.slane %v242, %v356
    %vm358 = vcmask 589312
    %v359 = vsel %vm358, %v357, %v352
    %v360 = vadd.s32 %v299, 4294967224
    %v361 = vlaneseq
    %v362 = vshrl.u32 %v361, 7
    %v363 = vsub.s32 %v360, %v362
    %v364 = vrot.slane %v243, %v363
    %vm365 = vcmask 654912
    %v366 = vsel %vm365, %v364, %v359
    %v367 = vadd.s32 %v299, 4294967216
    %v368 = vlaneseq
    %v369 = vshrl.u32 %v368, 7
    %v370 = vsub.s32 %v367, %v369
    %v371 = vrot.slane %v244, %v370
    %vm372 = vcmask 720512
    %v373 = vsel %vm372, %v371, %v366
    %v374 = vadd.s32 %v299, 4294967208
    %v375 = vlaneseq
    %v376 = vshrl.u32 %v375, 7
    %v377 = vsub.s32 %v374, %v376
    %v378 = vrot.slane %v245, %v377
    %vm379 = vcmask 786112
    %v380 = vsel %vm379, %v378, %v373
    %v381 = vadd.s32 %v299, 4294967200
    %v382 = vlaneseq
    %v383 = vshrl.u32 %v382, 7
    %v384 = vsub.s32 %v381, %v383
    %v385 = vrot.slane %v246, %v384
    %vm386 = vcmask 851712
    %v387 = vsel %vm386, %v385, %v380
    %v388 = vadd.s32 %v299, 4294967192
    %v389 = vlaneseq
    %v390 = vshrl.u32 %v389, 7
    %v391 = vsub.s32 %v388, %v390
    %v392 = vrot.slane %v247, %v391
    %vm393 = vcmask 917312
    %v394 = vsel %vm393, %v392, %v387
    %v395 = vadd.s32 %v299, 4294967184
    %v396 = vlaneseq
    %v397 = vshrl.u32 %v396, 7
    %v398 = vsub.s32 %v395, %v397
    %v399 = vrot.slane %v248, %v398
    %vm400 = vcmask 982912
    %v401 = vsel %vm400, %v399, %v394
    %v402 = vadd.s32 %v299, 4294967176
    %v403 = vlaneseq
    %v404 = vshrl.u32 %v403, 7
    %v405 = vsub.s32 %v402, %v404
    %v406 = vrot.slane %v249, %v405
    %vm407 = vcmask 1048512
    %v408 = vsel %vm407, %v406, %v401
    %v409 = vlaneseq
    %v410 = vshrl.u32 %v409, 7
    %v411 = vsub.s32 %v299, %v410
    %v412 = vrot.slane %v250, %v411
    %v413 = vlaneseq
    %v414 = vshrl.u32 %v413, 7
    %v415 = vsub.s32 %v304, %v414
    %v416 = vrot.slane %v251, %v415
    %v417 = vsel %vm309, %v416, %v412
    %v418 = vlaneseq
    %v419 = vshrl.u32 %v418, 7
    %v420 = vsub.s32 %v311, %v419
    %v421 = vrot.slane %v252, %v420
    %v422 = vsel %vm316, %v421, %v417
    %v423 = vlaneseq
    %v424 = vshrl.u32 %v423, 7
    %v425 = vsub.s32 %v318, %v424
    %v426 = vrot.slane %v253, %v425
    %v427 = vsel %vm323, %v426, %v422
    %v428 = vlaneseq
    %v429 = vshrl.u32 %v428, 7
    %v430 = vsub.s32 %v325, %v429
    %v431 = vrot.slane %v254, %v430
    %v432 = vsel %vm330, %v431, %v427
    %v433 = vlaneseq
    %v434 = vshrl.u32 %v433, 7
    %v435 = vsub.s32 %v332, %v434
    %v436 = vrot.slane %v255, %v435
    %v437 = vsel %vm337, %v436, %v432
    %v438 = vlaneseq
    %v439 = vshrl.u32 %v438, 7
    %v440 = vsub.s32 %v339, %v439
    %v441 = vrot.slane %v256, %v440
    %v442 = vsel %vm344, %v441, %v437
    %v443 = vlaneseq
    %v444 = vshrl.u32 %v443, 7
    %v445 = vsub.s32 %v346, %v444
    %v446 = vrot.slane %v257, %v445
    %v447 = vsel %vm351, %v446, %v442
    %v448 = vlaneseq
    %v449 = vshrl.u32 %v448, 7
    %v450 = vsub.s32 %v353, %v449
    %v451 = vrot.slane %v258, %v450
    %v452 = vsel %vm358, %v451, %v447
    %v453 = vlaneseq
    %v454 = vshrl.u32 %v453, 7
    %v455 = vsub.s32 %v360, %v454
    %v456 = vrot.slane %v259, %v455
    %v457 = vsel %vm365, %v456, %v452
    %v458 = vlaneseq
    %v459 = vshrl.u32 %v458, 7
    %v460 = vsub.s32 %v367, %v459
    %v461 = vrot.slane %v260, %v460
    %v462 = vsel %vm372, %v461, %v457
    %v463 = vlaneseq
    %v464 = vshrl.u32 %v463, 7
    %v465 = vsub.s32 %v374, %v464
    %v466 = vrot.slane %v261, %v465
    %v467 = vsel %vm379, %v466, %v462
    %v468 = vlaneseq
    %v469 = vshrl.u32 %v468, 7
    %v470 = vsub.s32 %v381, %v469
    %v471 = vrot.slane %v262, %v470
    %v472 = vsel %vm386, %v471, %v467
    %v473 = vlaneseq
    %v474 = vshrl.u32 %v473, 7
    %v475 = vsub.s32 %v388, %v474
    %v476 = vrot.slane %v263, %v475
    %v477 = vsel %vm393, %v476, %v472
    %v478 = vlaneseq
    %v479 = vshrl.u32 %v478, 7
    %v480 = vsub.s32 %v395, %v479
    %v481 = vrot.slane %v264, %v480
    %v482 = vsel %vm400, %v481, %v477
    %v483 = vlaneseq
    %v484 = vshrl.u32 %v483, 7
    %v485 = vsub.s32 %v402, %v484
    %v486 = vrot.slane %v265, %v485
    %v487 = vsel %vm407, %v486, %v482
    %vm488 = vcmask 1041409
    %v489 = vsel %vm488, %v487, %v408
    %491 = vst [vmem:[#allocation2] sm:$0x3] %v489
    // Predicated region
    $region6: #{tpu_custom_call.1} parent=1 // pred_check
      _
    $region7: #{tpu_custom_call.1} parent=1 // pred_check_branch
      %493 = sbr.rel (0) target = $region9
    $region8: #{tpu_custom_call.1} parent=1 // pred_region
      %s495 = ssub.s32 32, 32
      %496 = vsyncadd [#allocation3], %s495
      %s498 = sshll.u32 [#allocation2], 4
      %s499 = int_to_ptr.vmem [resolvable:$true] %s498
      %501 = dma.vmem_to_hbm [thread:$0]  %s499, 32, %s1, [#allocation3]
    $region9: #{tpu_custom_call.1} parent=1 // pred_fallthru
      _
    // Predicated region
    $region10: #{tpu_custom_call.1} parent=1 // pred_check
      _
    $region11: #{tpu_custom_call.1} parent=1 // pred_check_branch
      %503 = sbr.rel (0) target = $region13
    $region12: #{tpu_custom_call.1} parent=1 // pred_region
      %504 = dma.done [#allocation3], 32
    $region13: #{tpu_custom_call.1} parent=1 // pred_fallthru
      _
    %505 = vsyncpa [#allocation3], 1

</llo_original>
